<compile_context>
chip_gen: v6e
topology: v6e:2x2x1
jax: 0.10.0
libtpu: 0.0.40
codegen_flags: <defaults>
</compile_context>

<pallas_src>
from functools import partial

import jax
import jax.numpy as jnp
from jax import lax
from jax.experimental import pallas as pl
from jax.experimental.pallas import tpu as pltpu

BN_EPS = 1e-5
NORM_EPS = 1e-12            # torch F.normalize default eps
NORM_EPS_SQ = NORM_EPS * NORM_EPS

# v6e / v7x knob: cast MXU operands to bf16 (weights R/S are 0/1 so exact);
# requires relaxing the self-check tolerance to ~1e-3.  Off by default.
MXU_BF16 = False


def _mxu(v):
    """Optional bf16 cast for MXU operands only (elementwise math stays f32)."""
    return v.astype(jnp.bfloat16) if MXU_BF16 else v


# --------------------------------------------------------------------------- #
# Kernels
# --------------------------------------------------------------------------- #
def _netvlagd_epilogue(x2d, act, mean, ex2, consts_ref, st_ref, out_ref,
                       btile, t):
    """Shared per-tile tail: BN -> softmax -> Khatri-Rao aggregation ->
    gating -> fused double L2 normalization -> lane-dense store."""
    f = x2d.shape[1]
    c = mean.shape[1]
    fc = out_ref.shape[1]

    # consts pack (rows): [0:F] = R, [F:F+C] = S, [F+C] = sigmoid(gate).T flat.
    r_mat = consts_ref[0:f, :]                       # (F, F*C)
    s_mat = consts_ref[f:f + c, :]                   # (C, F*C)
    gate = consts_ref[f + c:f + c + 1, :]            # (1, F*C)

    # --- BatchNorm1d (training-mode batch stats), var = E[x^2] - mean^2 -----
    inv_std = lax.rsqrt(ex2 - mean * mean + BN_EPS)  # (1, C)
    act = (act - mean) * inv_std

    # --- softmax over the cluster (lane) axis --------------------------------
    act = act - jnp.max(act, axis=-1, keepdims=True)
    act = jnp.exp(act)
    act = act * pl.reciprocal(jnp.sum(act, axis=-1, keepdims=True),
                              approx=False)

    # --- lane-dense Khatri-Rao aggregation -----------------------------------
    # out[b, f*C + c] = sum_t x[b,t,f] * act[b,t,c]
    x_exp = jnp.dot(_mxu(x2d), _mxu(r_mat),
                    preferred_element_type=jnp.float32)       # (B_T*T, F*C)
    a_exp = jnp.dot(_mxu(act), _mxu(s_mat),
                    preferred_element_type=jnp.float32)       # (B_T*T, F*C)
    prod = (x_exp * a_exp).reshape(btile, t, fc)
    vlagd = jnp.sum(prod, axis=1)                             # (B_T, F*C)

    # --- gating (sigmoid precomputed at setup) -------------------------------
    vlagd = vlagd * gate

    # --- fused double L2 normalization ---------------------------------------
    # 1) per-(b, c) normalize over the feature axis; 2) per-batch global
    # normalize of the flat 512-vector.  Both folded into one multiply.
    sq = vlagd * vlagd
    rowsumsq = jnp.dot(sq, st_ref[...],
                       preferred_element_type=jnp.float32)    # (B_T, C)
    inv_row = lax.rsqrt(jnp.maximum(rowsumsq, NORM_EPS_SQ))   # (B_T, C)
    g_sumsq = jnp.sum(rowsumsq * (inv_row * inv_row),
                      axis=1, keepdims=True)                  # (B_T, 1)
    inv_glob = lax.rsqrt(jnp.maximum(g_sumsq, NORM_EPS_SQ))   # (B_T, 1)
    scale = jnp.dot(inv_row * inv_glob, s_mat,
                    preferred_element_type=jnp.float32)       # (B_T, F*C)

    out_ref[...] = (vlagd * scale).astype(out_ref.dtype)      # 512-lane store


def netvlagd_fused_kernel(x_ref, wt_ref, consts_ref, st_ref, out_ref):
    """Single-tile path (whole batch resident): BN stats computed locally."""
    x = x_ref[...]
    btile, t, f = x.shape
    x2d = x.reshape(btile * t, f)
    act = jnp.dot(_mxu(x2d), _mxu(wt_ref[...]),
                  preferred_element_type=jnp.float32)          # (B*T, C)
    inv_n = 1.0 / (btile * t)
    mean = jnp.sum(act, axis=0, keepdims=True) * inv_n
    ex2 = jnp.sum(act * act, axis=0, keepdims=True) * inv_n
    _netvlagd_epilogue(x2d, act, mean, ex2, consts_ref, st_ref, out_ref,
                       btile, t)


def bn_stats_kernel(x_ref, wt_ref, sum_ref, sumsq_ref):
    """Pass 1 (batch-tiled, 'arbitrary'): accumulate global BN statistics."""
    @pl.when(pl.program_id(0) == 0)
    def _():
        sum_ref[...] = jnp.zeros_like(sum_ref)
        sumsq_ref[...] = jnp.zeros_like(sumsq_ref)

    x = x_ref[...]
    btile, t, f = x.shape
    x2d = x.reshape(btile * t, f)
    act = jnp.dot(_mxu(x2d), _mxu(wt_ref[...]),
                  preferred_element_type=jnp.float32)          # (B_T*T, C)
    sum_ref[...] += jnp.sum(act, axis=0, keepdims=True)
    sumsq_ref[...] += jnp.sum(act * act, axis=0, keepdims=True)


def netvlagd_tiled_kernel(sum_ref, sumsq_ref, x_ref, wt_ref, consts_ref,
                          st_ref, out_ref, *, inv_n):
    """Pass 2 (batch-tiled, 'parallel'): per-tile compute with global stats."""
    x = x_ref[...]
    btile, t, f = x.shape
    x2d = x.reshape(btile * t, f)
    act = jnp.dot(_mxu(x2d), _mxu(wt_ref[...]),
                  preferred_element_type=jnp.float32)
    mean = sum_ref[...] * inv_n
    ex2 = sumsq_ref[...] * inv_n
    _netvlagd_epilogue(x2d, act, mean, ex2, consts_ref, st_ref, out_ref,
                       btile, t)


# --------------------------------------------------------------------------- #
# Setup-time parameter packing (one-time, per review)
# --------------------------------------------------------------------------- #
def pack_params(fc_weight, gate_weight):
    """Returns (wt, consts, st):
       wt     = fc_weight.T                         (F, C)
       consts = [R ; S ; sigmoid(gate_weight).T.flat] stacked    (F+C+1, F*C)
       st     = S.T                                  (F*C, C)
    R/S are the 0/1 Khatri-Rao expansion matrices (q = f*C + c)."""
    c, f = fc_weight.shape
    fc = f * c
    wt = fc_weight.T.astype(jnp.float32)
    gate_flat = jax.nn.sigmoid(gate_weight).T.reshape(1, fc)    # q = f*C + c
    q = jnp.arange(fc)
    r_mat = (q[None, :] // c == jnp.arange(f)[:, None]).astype(jnp.float32)
    s_mat = (q[None, :] % c == jnp.arange(c)[:, None]).astype(jnp.float32)
    consts = jnp.concatenate([r_mat, s_mat, gate_flat],
                             axis=0).astype(jnp.float32)        # (F+C+1, F*C)
    st = s_mat.T.astype(jnp.float32)                            # (F*C, C)
    return wt, consts, st


def _pick_b_tile(batch, target=32):
    """Batch tile: target*T = 256 MXU rows; per-tile live set ~1.5 MB (safe
    against v7x's 64 MiB VMEM).  Must divide B and be a multiple of 8 (output
    block second-minor dim) unless it covers the whole batch."""
    if batch <= target:
        return batch
    for cand in range(target, 7, -1):
        if cand % 8 == 0 and batch % cand == 0:
            return cand
    return batch      # no clean tiling -> whole batch in one tile


# --------------------------------------------------------------------------- #
# Forward wrapper
# --------------------------------------------------------------------------- #
@jax.jit
def netvlagd_forward(x, wt, consts, st):
    """x: (B, T, F) f32; packed params from pack_params.  Returns (B, C*F)."""
    B, T, F = x.shape
    C = wt.shape[1]
    FC = F * C
    b_tile = _pick_b_tile(B)
    nb = B // b_tile

    const_specs = [
        pl.BlockSpec((F, C), lambda i: (0, 0)),              # wt (resident)
        pl.BlockSpec((F + C + 1, FC), lambda i: (0, 0)),     # R | S | gate
        pl.BlockSpec((FC, C), lambda i: (0, 0)),             # S^T
    ]
    out_spec = pl.BlockSpec((b_tile, FC), lambda i: (i, 0))  # 512-lane dense
    x_idx = lambda i: (i, 0, 0)
    if nb > 2:
        # Deep grid: triple-buffer the streamed x tiles (tens of KB each).
        x_spec = pl.BlockSpec((b_tile, T, F), x_idx,
                              pipeline_mode=pl.Buffered(3))
    else:
        x_spec = pl.BlockSpec((b_tile, T, F), x_idx)

    if nb == 1:
        # Whole batch resident in one tile: BN stats are local, single dispatch.
        return pl.pallas_call(
            netvlagd_fused_kernel,
            out_shape=jax.ShapeDtypeStruct((B, FC), jnp.float32),
            grid=(1,),
            in_specs=[x_spec] + const_specs,
            out_specs=out_spec,
            compiler_params=pltpu.CompilerParams(
                dimension_semantics=("arbitrary",)),
        )(x, wt, consts, st)

    # Pass 1: exact train-mode BN statistics over ALL B*T rows (accumulator).
    act_sum, act_sumsq = pl.pallas_call(
        bn_stats_kernel,
        out_shape=(jax.ShapeDtypeStruct((1, C), jnp.float32),
                   jax.ShapeDtypeStruct((1, C), jnp.float32)),
        grid=(nb,),
        in_specs=[pl.BlockSpec((b_tile, T, F), x_idx),
                  pl.BlockSpec((F, C), lambda i: (0, 0))],
        out_specs=(pl.BlockSpec((1, C), lambda i: (0, 0)),
                   pl.BlockSpec((1, C), lambda i: (0, 0))),
        compiler_params=pltpu.CompilerParams(
            dimension_semantics=("arbitrary",)),
    )(x, wt)

    # Pass 2: independent batch tiles -> "parallel" (v7x megacore sharding).
    return pl.pallas_call(
        partial(netvlagd_tiled_kernel, inv_n=1.0 / (B * T)),
        out_shape=jax.ShapeDtypeStruct((B, FC), jnp.float32),
        grid=(nb,),
        in_specs=[pl.BlockSpec((1, C), lambda i: (0, 0)),
                  pl.BlockSpec((1, C), lambda i: (0, 0)),
                  x_spec] + const_specs,
        out_specs=out_spec,
        compiler_params=pltpu.CompilerParams(
            dimension_semantics=("parallel",)),
    )(act_sum, act_sumsq, x, wt, consts, st)


# --------------------------------------------------------------------------- #
# Pure-JAX reference (replicates the torch forward, train-mode BN)
# --------------------------------------------------------------------------- #
def netvlagd_reference(x, fc_weight, gate_weight):
    B, T, F = x.shape
    C = fc_weight.shape[0]
    xf = x.reshape(B * T, F)
    act = xf @ fc_weight.T
    mean = jnp.mean(act, axis=0, keepdims=True)
    var = jnp.mean((act - mean) ** 2, axis=0, keepdims=True)
    act = (act - mean) / jnp.sqrt(var + BN_EPS)
    act = jax.nn.softmax(act, axis=1)
    act = act.reshape(B, T, C).transpose(0, 2, 1)          # (B, C, T)
    vlagd = act @ xf.reshape(B, T, F)                      # (B, C, F)
    vlagd = vlagd * jax.nn.sigmoid(gate_weight)
    vlagd = vlagd.transpose(0, 2, 1)                       # (B, F, C)
    n1 = jnp.sqrt(jnp.sum(vlagd * vlagd, axis=1, keepdims=True))
    vlagd = vlagd / jnp.maximum(n1, NORM_EPS)
    vlagd = vlagd.reshape(B, C * F)
    n2 = jnp.sqrt(jnp.sum(vlagd * vlagd, axis=1, keepdims=True))
    return vlagd / jnp.maximum(n2, NORM_EPS)


if __name__ == "__main__":
    # Small shapes consistent with the module's forward.
    B, T, F, C = 2, 8, 32, 16

    key = jax.random.PRNGKey(0)
    kx, kw, kg, kx2 = jax.random.split(key, 4)

    x = jax.random.normal(kx, (B, T, F), dtype=jnp.float32)

    # nn.Linear(feature_size, cluster_size, bias=False): weight (C, F),
    # default init ~ uniform(-1/sqrt(F), 1/sqrt(F)).
    fc_weight = jax.random.uniform(
        kw, (C, F), dtype=jnp.float32,
        minval=-1.0 / jnp.sqrt(F), maxval=1.0 / jnp.sqrt(F))

    # gate_weight: xavier_normal_ on a (C, F) parameter.
    xavier_std = (2.0 / (C + F)) ** 0.5
    gate_weight = xavier_std * jax.random.normal(kg, (C, F), dtype=jnp.float32)

    wt, consts, st = pack_params(fc_weight, gate_weight)   # one-time repack

    # --- check 1: small batch -> fused single-dispatch path -----------------
    out = jax.block_until_ready(netvlagd_forward(x, wt, consts, st))
    ref = netvlagd_reference(x, fc_weight, gate_weight)
    assert out.shape == (B, C * F)
    assert jnp.allclose(out, ref, rtol=1e-5, atol=1e-5), \
        "mismatch vs reference (fused path)"

    # --- check 2: larger batch -> two-pass batch-tiled path ------------------
    # (global BN-stats accumulator kernel + 'parallel' tiled main kernel)
    B2 = 64
    x2 = jax.random.normal(kx2, (B2, T, F), dtype=jnp.float32)
    out2 = jax.block_until_ready(netvlagd_forward(x2, wt, consts, st))
    ref2 = netvlagd_reference(x2, fc_weight, gate_weight)
    assert out2.shape == (B2, C * F)
    assert jnp.allclose(out2, ref2, rtol=1e-5, atol=1e-5), \
        "mismatch vs reference (tiled path)"

    print("KERNEL_OK")
</pallas_src>

<mosaic_0001>
module attributes {stable_mosaic.version = 11 : i64} {
  func.func @netvlagd_fused_kernel(%arg0: i32, %arg1: memref<2x8x32xf32, #tpu.memory_space<vmem>>, %arg2: memref<32x16xf32, #tpu.memory_space<vmem>>, %arg3: memref<49x512xf32, #tpu.memory_space<vmem>>, %arg4: memref<512x16xf32, #tpu.memory_space<vmem>>, %arg5: memref<2x512xf32, #tpu.memory_space<vmem>>) attributes {dimension_semantics = [#tpu.dimension_semantics<arbitrary>], iteration_bounds = array<i64: 1>, scalar_prefetch = 0 : i64, scratch_operands = 0 : i64, tpu.core_type = #tpu.core_type<tc>, window_params = [{transform_indices = @transform_0, window_bounds = array<i64: 2, 8, 32>}, {pipeline_mode = #tpu.pipeline_mode<synchronous>, transform_indices = @transform_1, window_bounds = array<i64: 32, 16>}, {pipeline_mode = #tpu.pipeline_mode<synchronous>, transform_indices = @transform_2, window_bounds = array<i64: 49, 512>}, {pipeline_mode = #tpu.pipeline_mode<synchronous>, transform_indices = @transform_3, window_bounds = array<i64: 512, 16>}, {transform_indices = @transform_4, window_bounds = array<i64: 2, 512>}]} {
    %c0 = arith.constant 0 : index
    %c0_0 = arith.constant 0 : index
    %c0_1 = arith.constant 0 : index
    %0 = vector.load %arg1[%c0, %c0_0, %c0_1] : memref<2x8x32xf32, #tpu.memory_space<vmem>>, vector<2x8x32xf32>
    %1 = vector.shape_cast %0 : vector<2x8x32xf32> to vector<16x32xf32>
    %c0_2 = arith.constant 0 : index
    %c0_3 = arith.constant 0 : index
    %2 = vector.load %arg2[%c0_2, %c0_3] : memref<32x16xf32, #tpu.memory_space<vmem>>, vector<32x16xf32>
    %cst = arith.constant dense<0.000000e+00> : vector<16x16xf32>
    %3 = tpu.matmul %1, %2, %cst {dimension_numbers = #tpu.dot_dimension_numbers<[1], [0], [0], [1], [0, 0, 1, 1], [], []>} : vector<16x32xf32>, vector<32x16xf32>, vector<16x16xf32> -> vector<16x16xf32>
    %cst_4 = arith.constant dense<0.000000e+00> : vector<16xf32>
    %4 = vector.multi_reduction <add>, %3, %cst_4 [0] : vector<16x16xf32> to vector<16xf32>
    %5 = vector.shape_cast %4 : vector<16xf32> to vector<1x16xf32>
    %cst_5 = arith.constant 6.250000e-02 : f32
    %6 = vector.broadcast %cst_5 : f32 to vector<1x16xf32>
    %7 = arith.mulf %5, %6 : vector<1x16xf32>
    %8 = arith.mulf %3, %3 : vector<16x16xf32>
    %cst_6 = arith.constant dense<0.000000e+00> : vector<16xf32>
    %9 = vector.multi_reduction <add>, %8, %cst_6 [0] : vector<16x16xf32> to vector<16xf32>
    %10 = vector.shape_cast %9 : vector<16xf32> to vector<1x16xf32>
    %cst_7 = arith.constant 6.250000e-02 : f32
    %11 = vector.broadcast %cst_7 : f32 to vector<1x16xf32>
    %12 = arith.mulf %10, %11 : vector<1x16xf32>
    %c0_8 = arith.constant 0 : index
    %c0_9 = arith.constant 0 : index
    %13 = vector.load %arg3[%c0_8, %c0_9] : memref<49x512xf32, #tpu.memory_space<vmem>>, vector<32x512xf32>
    %c32 = arith.constant 32 : index
    %c0_10 = arith.constant 0 : index
    %14 = vector.load %arg3[%c32, %c0_10] : memref<49x512xf32, #tpu.memory_space<vmem>>, vector<16x512xf32>
    %c48 = arith.constant 48 : index
    %c0_11 = arith.constant 0 : index
    %15 = vector.load %arg3[%c48, %c0_11] : memref<49x512xf32, #tpu.memory_space<vmem>>, vector<1x512xf32>
    %16 = arith.mulf %7, %7 : vector<1x16xf32>
    %17 = arith.subf %12, %16 : vector<1x16xf32>
    %cst_12 = arith.constant 9.99999974E-6 : f32
    %18 = vector.broadcast %cst_12 : f32 to vector<1x16xf32>
    %19 = arith.addf %17, %18 : vector<1x16xf32>
    %20 = math.rsqrt %19 : vector<1x16xf32>
    %21 = vector.broadcast %7 : vector<1x16xf32> to vector<16x16xf32>
    %22 = arith.subf %3, %21 : vector<16x16xf32>
    %23 = vector.broadcast %20 : vector<1x16xf32> to vector<16x16xf32>
    %24 = arith.mulf %22, %23 : vector<16x16xf32>
    %cst_13 = arith.constant dense<0xFF800000> : vector<16xf32>
    %25 = vector.multi_reduction <maximumf>, %24, %cst_13 [1] : vector<16x16xf32> to vector<16xf32>
    %26 = vector.shape_cast %25 : vector<16xf32> to vector<16x1xf32>
    %27 = vector.broadcast %26 : vector<16x1xf32> to vector<16x16xf32>
    %28 = arith.subf %24, %27 : vector<16x16xf32>
    %29 = math.exp %28 : vector<16x16xf32>
    %cst_14 = arith.constant dense<0.000000e+00> : vector<16xf32>
    %30 = vector.multi_reduction <add>, %29, %cst_14 [1] : vector<16x16xf32> to vector<16xf32>
    %31 = vector.shape_cast %30 : vector<16xf32> to vector<16x1xf32>
    %32 = tpu.reciprocal %31 : vector<16x1xf32> -> vector<16x1xf32>
    %33 = vector.broadcast %32 : vector<16x1xf32> to vector<16x16xf32>
    %34 = arith.mulf %29, %33 : vector<16x16xf32>
    %cst_15 = arith.constant dense<0.000000e+00> : vector<16x512xf32>
    %35 = tpu.matmul %1, %13, %cst_15 {dimension_numbers = #tpu.dot_dimension_numbers<[1], [0], [0], [1], [0, 0, 1, 1], [], []>} : vector<16x32xf32>, vector<32x512xf32>, vector<16x512xf32> -> vector<16x512xf32>
    %cst_16 = arith.constant dense<0.000000e+00> : vector<16x512xf32>
    %36 = tpu.matmul %34, %14, %cst_16 {dimension_numbers = #tpu.dot_dimension_numbers<[1], [0], [0], [1], [0, 0, 1, 1], [], []>} : vector<16x16xf32>, vector<16x512xf32>, vector<16x512xf32> -> vector<16x512xf32>
    %37 = arith.mulf %35, %36 : vector<16x512xf32>
    %38 = vector.shape_cast %37 : vector<16x512xf32> to vector<2x8x512xf32>
    %cst_17 = arith.constant dense<0.000000e+00> : vector<2x512xf32>
    %39 = vector.multi_reduction <add>, %38, %cst_17 [1] : vector<2x8x512xf32> to vector<2x512xf32>
    %40 = vector.broadcast %15 : vector<1x512xf32> to vector<2x512xf32>
    %41 = arith.mulf %39, %40 : vector<2x512xf32>
    %42 = arith.mulf %41, %41 : vector<2x512xf32>
    %c0_18 = arith.constant 0 : index
    %c0_19 = arith.constant 0 : index
    %43 = vector.load %arg4[%c0_18, %c0_19] : memref<512x16xf32, #tpu.memory_space<vmem>>, vector<512x16xf32>
    %cst_20 = arith.constant dense<0.000000e+00> : vector<2x16xf32>
    %44 = tpu.matmul %42, %43, %cst_20 {dimension_numbers = #tpu.dot_dimension_numbers<[1], [0], [0], [1], [0, 0, 1, 1], [], []>} : vector<2x512xf32>, vector<512x16xf32>, vector<2x16xf32> -> vector<2x16xf32>
    %cst_21 = arith.constant 1.000000e-24 : f32
    %45 = vector.broadcast %cst_21 : f32 to vector<2x16xf32>
    %46 = arith.maximumf %44, %45 : vector<2x16xf32>
    %47 = math.rsqrt %46 : vector<2x16xf32>
    %48 = arith.mulf %47, %47 : vector<2x16xf32>
    %49 = arith.mulf %44, %48 : vector<2x16xf32>
    %cst_22 = arith.constant dense<0.000000e+00> : vector<2xf32>
    %50 = vector.multi_reduction <add>, %49, %cst_22 [1] : vector<2x16xf32> to vector<2xf32>
    %51 = vector.shape_cast %50 : vector<2xf32> to vector<2x1xf32>
    %cst_23 = arith.constant 1.000000e-24 : f32
    %52 = vector.broadcast %cst_23 : f32 to vector<2x1xf32>
    %53 = arith.maximumf %51, %52 : vector<2x1xf32>
    %54 = math.rsqrt %53 : vector<2x1xf32>
    %55 = vector.broadcast %54 : vector<2x1xf32> to vector<2x16xf32>
    %56 = arith.mulf %47, %55 : vector<2x16xf32>
    %cst_24 = arith.constant dense<0.000000e+00> : vector<2x512xf32>
    %57 = tpu.matmul %56, %14, %cst_24 {dimension_numbers = #tpu.dot_dimension_numbers<[1], [0], [0], [1], [0, 0, 1, 1], [], []>} : vector<2x16xf32>, vector<16x512xf32>, vector<2x512xf32> -> vector<2x512xf32>
    %58 = arith.mulf %41, %57 : vector<2x512xf32>
    %c0_25 = arith.constant 0 : index
    %c0_26 = arith.constant 0 : index
    %59 = vector.load %arg5[%c0_25, %c0_26] : memref<2x512xf32, #tpu.memory_space<vmem>>, vector<2x512xf32>
    tpu.vector_store %arg5[%c0_25, %c0_26], %58 {strides = array<i32>} : memref<2x512xf32, #tpu.memory_space<vmem>>, vector<2x512xf32>,
    return
  }
  func.func @transform_0(%arg0: i32) -> (i32, i32, i32) {
    %c0_i32 = arith.constant 0 : i32
    %c0_i32_0 = arith.constant 0 : i32
    %c0_i32_1 = arith.constant 0 : i32
    return %arg0, %c0_i32, %c0_i32_0 : i32, i32, i32
  }
  func.func @transform_1(%arg0: i32) -> (i32, i32) {
    %c0_i32 = arith.constant 0 : i32
    %c0_i32_0 = arith.constant 0 : i32
    %c0_i32_1 = arith.constant 0 : i32
    return %c0_i32, %c0_i32_0 : i32, i32
  }
  func.func @transform_2(%arg0: i32) -> (i32, i32) {
    %c0_i32 = arith.constant 0 : i32
    %c0_i32_0 = arith.constant 0 : i32
    %c0_i32_1 = arith.constant 0 : i32
    return %c0_i32, %c0_i32_0 : i32, i32
  }
  func.func @transform_3(%arg0: i32) -> (i32, i32) {
    %c0_i32 = arith.constant 0 : i32
    %c0_i32_0 = arith.constant 0 : i32
    %c0_i32_1 = arith.constant 0 : i32
    return %c0_i32, %c0_i32_0 : i32, i32
  }
  func.func @transform_4(%arg0: i32) -> (i32, i32) {
    %c0_i32 = arith.constant 0 : i32
    %c0_i32_0 = arith.constant 0 : i32
    return %arg0, %c0_i32 : i32, i32
  }
}

</mosaic_0001>

<llo_original>
// kernel: netvlagd_forward.1
$region0: #{netvlagd_forward.1}
  #allocation0 [shape = 'u32[]', space=smem, size = 0x4, offset = 0x4, fixed_abs, tag = 'smem constant byte address 0x4 - core index']
  #allocation1 [shape = 'u32[144,128]{1,0:T(1,128)}', space=vmem, size = 0x12000, scoped, tag = 'internal scratch']
  %s0 = inlined_call_operand.vmem [shape: f32[2,8,32], index: 0, kind: input, shape index: {}]
  %s1 = inlined_call_operand.vmem [shape: f32[32,16], index: 1, kind: input, shape index: {}]
  %s2 = inlined_call_operand.vmem [shape: f32[49,512], index: 2, kind: input, shape index: {}]
  %s3 = inlined_call_operand.vmem [shape: f32[512,16], index: 3, kind: input, shape index: {}]
  %s4 = inlined_call_operand.hbm [shape: f32[2,512], index: 4, kind: output, shape index: {}]
  %s5 = sld [smem:[#allocation0]]
  $region26: #{netvlagd_forward.1} parent=0
    _
  %s7 = ssub.s32 1, %s5
  %s8 = scalar_select 0, %s7, %s5
  $region1: #{netvlagd_forward.1} parent=0
    #allocation2 [shape = 'u8[4096]{0}', space=vmem, size = 0x1000, scoped, tag = 'output window, operand 0, single buffered']
    #allocation3 [shape = 's32[1]{0}', space=sflag, size = 0x4, scoped, tag = 'scoped memory for netvlagd_forward.1']
    %9 = vsyncpa [#allocation3], 0
    // Predicated region
    $region2: #{netvlagd_forward.1} parent=1 // pred_check
      _
    $region3: #{netvlagd_forward.1} parent=1 // pred_check_branch
      %11 = sbr.rel (0) target = $region5
    $region4: #{netvlagd_forward.1} parent=1 // pred_region
      _
    $region5: #{netvlagd_forward.1} parent=1 // pred_fallthru
      _
    // Predicated region
    $region6: #{netvlagd_forward.1} parent=1 // pred_check
      _
    $region7: #{netvlagd_forward.1} parent=1 // pred_check_branch
      %13 = sbr.rel (0) target = $region9
    $region8: #{netvlagd_forward.1} parent=1 // pred_region
      _
    $region9: #{netvlagd_forward.1} parent=1 // pred_fallthru
      _
    // Predicated region
    $region10: #{netvlagd_forward.1} parent=1 // pred_check
      _
    $region11: #{netvlagd_forward.1} parent=1 // pred_check_branch
      %15 = sbr.rel (0) target = $region13
    $region12: #{netvlagd_forward.1} parent=1 // pred_region
      _
    $region13: #{netvlagd_forward.1} parent=1 // pred_fallthru
      _
    // Predicated region
    $region14: #{netvlagd_forward.1} parent=1 // pred_check
      _
    $region15: #{netvlagd_forward.1} parent=1 // pred_check_branch
      %17 = sbr.rel (0) target = $region17
    $region16: #{netvlagd_forward.1} parent=1 // pred_region
      _
    $region17: #{netvlagd_forward.1} parent=1 // pred_fallthru
      _
    %v18 = vld [vmem:[%s0] sm:$0xff]
    %v19 = vld [vmem:[%s0 + $0x8] sm:$0xff]
    %v20 = vld [vmem:[%s1] sm:$0xff]
    %v21 = vld [vmem:[%s1 + $0x8] sm:$0xff]
    %v22 = vld [vmem:[%s1 + $0x10] sm:$0xff]
    %v23 = vld [vmem:[%s1 + $0x18] sm:$0xff]
    %vm24 = vcmask 261120
    %v26 = vsel %vm24, %v18, 0
    %v29 = vsel %vm24, %v19, 0
    %31 = vmatprep.subr.mxu0 0.0
    %32 = vmatpush1.msra.mxu0 0.0
    %33 = vmatprep.subr.mxu0 0.0
    %34 = vmatpush1.msra.mxu0 0.0
    %35 = vmatprep.subr.mxu0 0.0
    %36 = vmatpush1.msra.mxu0 0.0
    %37 = vmatprep.subr.mxu0 0.0
    %38 = vmatpush1.msra.mxu0 0.0
    %39 = vmatprep.subr.mxu0 0.0
    %40 = vmatpush1.msra.mxu0 0.0
    %41 = vmatprep.subr.mxu0 0.0
    %42 = vmatpush1.msra.mxu0 0.0
    %43 = vmatprep.subr.mxu0 0.0
    %44 = vmatpush1.msra.mxu0 0.0
    %45 = vmatprep.subr.mxu0 0.0
    %46 = vmatpush1.msra.mxu0 0.0
    %47 = vmatprep.subr.mxu0 0.0
    %48 = vmatpush1.msra.mxu0 0.0
    %49 = vmatprep.subr.mxu0 0.0
    %50 = vmatpush1.msra.mxu0 0.0
    %51 = vmatprep.subr.mxu0 0.0
    %52 = vmatpush1.msra.mxu0 0.0
    %53 = vmatprep.subr.mxu0 0.0
    %54 = vmatpush1.msra.mxu0 0.0
    %55 = vmatprep.subr.mxu0 0.0
    %56 = vmatpush1.msra.mxu0 %v23
    %57 = vmatprep.subr.mxu0 0.0
    %58 = vmatpush1.msra.mxu0 %v22
    %59 = vmatprep.subr.mxu0 0.0
    %60 = vmatpush1.msra.mxu0 %v21
    %61 = vmatprep.subr.mxu0 0.0
    %62 = vmatpush1.msra.mxu0 %v20
    %63 = vmatprep.subr.mxu0 0.0
    %64 = vmatpush2.msra.mxu0 0.0
    %65 = vmatprep.subr.mxu0 0.0
    %66 = vmatpush2.msra.mxu0 0.0
    %67 = vmatprep.subr.mxu0 0.0
    %68 = vmatpush2.msra.mxu0 0.0
    %69 = vmatprep.subr.mxu0 0.0
    %70 = vmatpush2.msra.mxu0 0.0
    %71 = vmatprep.subr.mxu0 0.0
    %72 = vmatpush2.msra.mxu0 0.0
    %73 = vmatprep.subr.mxu0 0.0
    %74 = vmatpush2.msra.mxu0 0.0
    %75 = vmatprep.subr.mxu0 0.0
    %76 = vmatpush2.msra.mxu0 0.0
    %77 = vmatprep.subr.mxu0 0.0
    %78 = vmatpush2.msra.mxu0 0.0
    %79 = vmatprep.subr.mxu0 0.0
    %80 = vmatpush2.msra.mxu0 0.0
    %81 = vmatprep.subr.mxu0 0.0
    %82 = vmatpush2.msra.mxu0 0.0
    %83 = vmatprep.subr.mxu0 0.0
    %84 = vmatpush2.msra.mxu0 0.0
    %85 = vmatprep.subr.mxu0 0.0
    %86 = vmatpush2.msra.mxu0 0.0
    %87 = vmatprep.subr.mxu0 0.0
    %88 = vmatpush2.msra.mxu0 0.0
    %89 = vmatprep.subr.mxu0 0.0
    %90 = vmatpush2.msra.mxu0 0.0
    %91 = vmatprep.subr.mxu0 0.0
    %92 = vmatpush2.msra.mxu0 0.0
    %93 = vmatprep.subr.mxu0 0.0
    %94 = vmatpush2.msra.mxu0 0.0
    %95 = vmatprep.mubr.f32.mxu0 0.0
    %96 = vmatmul.mubr.f32.gmra.mxu0 %v26
    %v97 = vpop.f32.mrf.mxu0
    %v98 = vadd.f32 0.0, %v97
    %v99 = vpop.f32.mrf.mxu0
    %100 = vmatprep.mubr.f32.mxu0 0.0
    %101 = vmatmul.mubr.f32.gmra.mxu0 %v29
    %v102 = vpop.f32.mrf.mxu0
    %v103 = vadd.f32 0.0, %v102
    %v104 = vpop.f32.mrf.mxu0
    %105 = vdwg.mxu0
    %vm106 = vcmask 130048
    %v107 = vsel %vm106, %v98, 0.0
    %v108 = vsel %vm106, %v103, 0.0
    %v109 = vadd.f32 %v107, %v108
    %v110 = vrot.slane %v109, 4
    %v111 = vadd.f32 %v109, %v110
    %v112 = vrot.slane %v111, 2
    %v113 = vadd.f32 %v111, %v112
    %v114 = vrot.slane %v113, 1
    %v115 = vadd.f32 %v113, %v114
    %v116 = vmul.f32 %v115, 0.0625
    %v117 = vmul.f32 %v98, %v98
    %v118 = vmul.f32 %v103, %v103
    %v119 = vsel %vm106, %v117, 0.0
    %v120 = vsel %vm106, %v118, 0.0
    %v121 = vadd.f32 %v119, %v120
    %v122 = vrot.slane %v121, 4
    %v123 = vadd.f32 %v121, %v122
    %v124 = vrot.slane %v123, 2
    %v125 = vadd.f32 %v123, %v124
    %v126 = vrot.slane %v125, 1
    %v127 = vadd.f32 %v125, %v126
    %v128 = vmul.f32 %v127, 0.0625
    %v129 = vld [vmem:[%s2] sm:$0xff]
    %v130 = vld [vmem:[%s2 + $0x8] sm:$0xff]
    %v131 = vld [vmem:[%s2 + $0x10] sm:$0xff]
    %v132 = vld [vmem:[%s2 + $0x18] sm:$0xff]
    %v133 = vld [vmem:[%s2 + $0x20] sm:$0xff]
    %v134 = vld [vmem:[%s2 + $0x28] sm:$0xff]
    %v135 = vld [vmem:[%s2 + $0x30] sm:$0xff]
    %v136 = vld [vmem:[%s2 + $0x38] sm:$0xff]
    %v137 = vld [vmem:[%s2 + $0x40] sm:$0xff]
    %v138 = vld [vmem:[%s2 + $0x48] sm:$0xff]
    %v139 = vld [vmem:[%s2 + $0x50] sm:$0xff]
    %v140 = vld [vmem:[%s2 + $0x58] sm:$0xff]
    %v141 = vld [vmem:[%s2 + $0x60] sm:$0xff]
    %v142 = vld [vmem:[%s2 + $0x68] sm:$0xff]
    %v143 = vld [vmem:[%s2 + $0x70] sm:$0xff]
    %v144 = vld [vmem:[%s2 + $0x78] sm:$0xff]
    %v145 = vld [vmem:[%s2 + $0x80] sm:$0xff]
    %v146 = vld [vmem:[%s2 + $0x88] sm:$0xff]
    %v147 = vld [vmem:[%s2 + $0x90] sm:$0xff]
    %v148 = vld [vmem:[%s2 + $0x98] sm:$0xff]
    %v149 = vld [vmem:[%s2 + $0xa0] sm:$0xff]
    %v150 = vld [vmem:[%s2 + $0xa8] sm:$0xff]
    %v151 = vld [vmem:[%s2 + $0xb0] sm:$0xff]
    %v152 = vld [vmem:[%s2 + $0xb8] sm:$0xff]
    %s153 = scalar_lea.vmem %s2, 192
    %v154 = vld [vmem:[%s153] ss:$8 sm:$0xf]
    %v155 = vmul.f32 %v116, %v116
    %v156 = vsub.f32 %v128, %v155
    %v157 = vadd.f32 %v156, 1e-05
    %v158 = vrsqrt.pop %v157
    %v159 = vsub.f32 %v98, %v116
    %v160 = vsub.f32 %v103, %v116
    %v161 = vmul.f32 %v159, %v158
    %v162 = vmul.f32 %v160, %v158
    %v163 = vsel %vm106, %v161, -inf
    %164 = vmax.xlane.f32.xlu0 %v163
    %v165 = vpop.xlane.xlu0 %164
    %v166 = vsel %vm106, %v162, -inf
    %167 = vmax.xlane.f32.xlu0 %v166
    %v168 = vpop.xlane.xlu0 %167
    %v169 = vsub.f32 %v161, %v165
    %v170 = vsub.f32 %v162, %v168
    %v171 = vmul.f32 %v169, 1.442695
    %v172 = vpow.pop %v171
    %v173 = vmul.f32 %v170, 1.442695
    %v174 = vpow.pop %v173
    %v175 = vsel %vm106, %v172, 0.0
    %176 = vadd.xlane.f32.xlu0 %v175
    %v177 = vpop.xlane.xlu0 %176
    %v178 = vsel %vm106, %v174, 0.0
    %179 = vadd.xlane.f32.xlu0 %v178
    %v180 = vpop.xlane.xlu0 %179
    %v181 = vrcp.pop %v177
    %v182 = vrcp.pop %v180
    %v183 = vmul.f32 %v172, %v181
    %v184 = vmul.f32 %v174, %v182
    %185 = vmatprep.subr.mxu0 0.0
    %186 = vmatpush1.msra.mxu0 0.0
    %187 = vmatprep.subr.mxu0 0.0
    %188 = vmatpush1.msra.mxu0 0.0
    %189 = vmatprep.subr.mxu0 0.0
    %190 = vmatpush1.msra.mxu0 0.0
    %191 = vmatprep.subr.mxu0 0.0
    %192 = vmatpush1.msra.mxu0 0.0
    %193 = vmatprep.subr.mxu0 0.0
    %194 = vmatpush1.msra.mxu0 0.0
    %195 = vmatprep.subr.mxu0 0.0
    %196 = vmatpush1.msra.mxu0 0.0
    %197 = vmatprep.subr.mxu0 0.0
    %198 = vmatpush1.msra.mxu0 0.0
    %199 = vmatprep.subr.mxu0 0.0
    %200 = vmatpush1.msra.mxu0 0.0
    %201 = vmatprep.subr.mxu0 0.0
    %202 = vmatpush1.msra.mxu0 0.0
    %203 = vmatprep.subr.mxu0 0.0
    %204 = vmatpush1.msra.mxu0 0.0
    %205 = vmatprep.subr.mxu0 0.0
    %206 = vmatpush1.msra.mxu0 0.0
    %207 = vmatprep.subr.mxu0 0.0
    %208 = vmatpush1.msra.mxu0 0.0
    %209 = vmatprep.subr.mxu0 %v142
    %210 = vmatpush1.msra.mxu0 %v141
    %211 = vmatprep.subr.mxu0 %v138
    %212 = vmatpush1.msra.mxu0 %v137
    %213 = vmatprep.subr.mxu0 %v134
    %214 = vmatpush1.msra.mxu0 %v133
    %215 = vmatprep.subr.mxu0 %v130
    %216 = vmatpush1.msra.mxu0 %v129
    %217 = vmatprep.subr.mxu0 0.0
    %218 = vmatpush2.msra.mxu0 0.0
    %219 = vmatprep.subr.mxu0 0.0
    %220 = vmatpush2.msra.mxu0 0.0
    %221 = vmatprep.subr.mxu0 0.0
    %222 = vmatpush2.msra.mxu0 0.0
    %223 = vmatprep.subr.mxu0 0.0
    %224 = vmatpush2.msra.mxu0 0.0
    %225 = vmatprep.subr.mxu0 0.0
    %226 = vmatpush2.msra.mxu0 0.0
    %227 = vmatprep.subr.mxu0 0.0
    %228 = vmatpush2.msra.mxu0 0.0
    %229 = vmatprep.subr.mxu0 0.0
    %230 = vmatpush2.msra.mxu0 0.0
    %231 = vmatprep.subr.mxu0 0.0
    %232 = vmatpush2.msra.mxu0 0.0
    %233 = vmatprep.subr.mxu0 0.0
    %234 = vmatpush2.msra.mxu0 0.0
    %235 = vmatprep.subr.mxu0 0.0
    %236 = vmatpush2.msra.mxu0 0.0
    %237 = vmatprep.subr.mxu0 0.0
    %238 = vmatpush2.msra.mxu0 0.0
    %239 = vmatprep.subr.mxu0 0.0
    %240 = vmatpush2.msra.mxu0 0.0
    %241 = vmatprep.subr.mxu0 0.0
    %242 = vmatpush2.msra.mxu0 0.0
    %243 = vmatprep.subr.mxu0 0.0
    %244 = vmatpush2.msra.mxu0 0.0
    %245 = vmatprep.subr.mxu0 0.0
    %246 = vmatpush2.msra.mxu0 0.0
    %247 = vmatprep.subr.mxu0 0.0
    %248 = vmatpush2.msra.mxu0 0.0
    %249 = vmatprep.mubr.f32.mxu0 0.0
    %250 = vmatmul.mubr.f32.gmra.mxu0 %v26
    %v251 = vpop.f32.mrf.mxu0
    %v252 = vadd.f32 0.0, %v251
    %v253 = vpop.f32.mrf.mxu0
    %v254 = vadd.f32 0.0, %v253
    %255 = vmatprep.mubr.f32.mxu0 0.0
    %256 = vmatmul.mubr.f32.gmra.mxu0 %v29
    %v257 = vpop.f32.mrf.mxu0
    %v258 = vadd.f32 0.0, %v257
    %v259 = vpop.f32.mrf.mxu0
    %v260 = vadd.f32 0.0, %v259
    %261 = vdwg.mxu0
    %262 = vmatprep.subr.mxu0 0.0
    %263 = vmatpush1.msra.mxu0 0.0
    %264 = vmatprep.subr.mxu0 0.0
    %265 = vmatpush1.msra.mxu0 0.0
    %266 = vmatprep.subr.mxu0 0.0
    %267 = vmatpush1.msra.mxu0 0.0
    %268 = vmatprep.subr.mxu0 0.0
    %269 = vmatpush1.msra.mxu0 0.0
    %270 = vmatprep.subr.mxu0 0.0
    %271 = vmatpush1.msra.mxu0 0.0
    %272 = vmatprep.subr.mxu0 0.0
    %273 = vmatpush1.msra.mxu0 0.0
    %274 = vmatprep.subr.mxu0 0.0
    %275 = vmatpush1.msra.mxu0 0.0
    %276 = vmatprep.subr.mxu0 0.0
    %277 = vmatpush1.msra.mxu0 0.0
    %278 = vmatprep.subr.mxu0 0.0
    %279 = vmatpush1.msra.mxu0 0.0
    %280 = vmatprep.subr.mxu0 0.0
    %281 = vmatpush1.msra.mxu0 0.0
    %282 = vmatprep.subr.mxu0 0.0
    %283 = vmatpush1.msra.mxu0 0.0
    %284 = vmatprep.subr.mxu0 0.0
    %285 = vmatpush1.msra.mxu0 0.0
    %286 = vmatprep.subr.mxu0 %v144
    %287 = vmatpush1.msra.mxu0 %v143
    %288 = vmatprep.subr.mxu0 %v140
    %289 = vmatpush1.msra.mxu0 %v139
    %290 = vmatprep.subr.mxu0 %v136
    %291 = vmatpush1.msra.mxu0 %v135
    %292 = vmatprep.subr.mxu0 %v132
    %293 = vmatpush1.msra.mxu0 %v131
    %294 = vmatprep.subr.mxu0 0.0
    %295 = vmatpush2.msra.mxu0 0.0
    %296 = vmatprep.subr.mxu0 0.0
    %297 = vmatpush2.msra.mxu0 0.0
    %298 = vmatprep.subr.mxu0 0.0
    %299 = vmatpush2.msra.mxu0 0.0
    %300 = vmatprep.subr.mxu0 0.0
    %301 = vmatpush2.msra.mxu0 0.0
    %302 = vmatprep.subr.mxu0 0.0
    %303 = vmatpush2.msra.mxu0 0.0
    %304 = vmatprep.subr.mxu0 0.0
    %305 = vmatpush2.msra.mxu0 0.0
    %306 = vmatprep.subr.mxu0 0.0
    %307 = vmatpush2.msra.mxu0 0.0
    %308 = vmatprep.subr.mxu0 0.0
    %309 = vmatpush2.msra.mxu0 0.0
    %310 = vmatprep.subr.mxu0 0.0
    %311 = vmatpush2.msra.mxu0 0.0
    %312 = vmatprep.subr.mxu0 0.0
    %313 = vmatpush2.msra.mxu0 0.0
    %314 = vmatprep.subr.mxu0 0.0
    %315 = vmatpush2.msra.mxu0 0.0
    %316 = vmatprep.subr.mxu0 0.0
    %317 = vmatpush2.msra.mxu0 0.0
    %318 = vmatprep.subr.mxu0 0.0
    %319 = vmatpush2.msra.mxu0 0.0
    %320 = vmatprep.subr.mxu0 0.0
    %321 = vmatpush2.msra.mxu0 0.0
    %322 = vmatprep.subr.mxu0 0.0
    %323 = vmatpush2.msra.mxu0 0.0
    %324 = vmatprep.subr.mxu0 0.0
    %325 = vmatpush2.msra.mxu0 0.0
    %326 = vmatprep.mubr.f32.mxu0 0.0
    %327 = vmatmul.mubr.f32.gmra.mxu0 %v26
    %v328 = vpop.f32.mrf.mxu0
    %v329 = vadd.f32 0.0, %v328
    %v330 = vpop.f32.mrf.mxu0
    %v331 = vadd.f32 0.0, %v330
    %332 = vmatprep.mubr.f32.mxu0 0.0
    %333 = vmatmul.mubr.f32.gmra.mxu0 %v29
    %v334 = vpop.f32.mrf.mxu0
    %v335 = vadd.f32 0.0, %v334
    %v336 = vpop.f32.mrf.mxu0
    %v337 = vadd.f32 0.0, %v336
    %338 = vdwg.mxu0
    %v340 = vsel %vm106, %v183, 0
    %v343 = vsel %vm106, %v184, 0
    %345 = vmatprep.subr.mxu0 0.0
    %346 = vmatpush1.msra.mxu0 0.0
    %347 = vmatprep.subr.mxu0 0.0
    %348 = vmatpush1.msra.mxu0 0.0
    %349 = vmatprep.subr.mxu0 0.0
    %350 = vmatpush1.msra.mxu0 0.0
    %351 = vmatprep.subr.mxu0 0.0
    %352 = vmatpush1.msra.mxu0 0.0
    %353 = vmatprep.subr.mxu0 0.0
    %354 = vmatpush1.msra.mxu0 0.0
    %355 = vmatprep.subr.mxu0 0.0
    %356 = vmatpush1.msra.mxu0 0.0
    %357 = vmatprep.subr.mxu0 0.0
    %358 = vmatpush1.msra.mxu0 0.0
    %359 = vmatprep.subr.mxu0 0.0
    %360 = vmatpush1.msra.mxu0 0.0
    %361 = vmatprep.subr.mxu0 0.0
    %362 = vmatpush1.msra.mxu0 0.0
    %363 = vmatprep.subr.mxu0 0.0
    %364 = vmatpush1.msra.mxu0 0.0
    %365 = vmatprep.subr.mxu0 0.0
    %366 = vmatpush1.msra.mxu0 0.0
    %367 = vmatprep.subr.mxu0 0.0
    %368 = vmatpush1.msra.mxu0 0.0
    %369 = vmatprep.subr.mxu0 0.0
    %370 = vmatpush1.msra.mxu0 0.0
    %371 = vmatprep.subr.mxu0 0.0
    %372 = vmatpush1.msra.mxu0 0.0
    %373 = vmatprep.subr.mxu0 %v150
    %374 = vmatpush1.msra.mxu0 %v149
    %375 = vmatprep.subr.mxu0 %v146
    %376 = vmatpush1.msra.mxu0 %v145
    %377 = vmatprep.subr.mxu0 0.0
    %378 = vmatpush2.msra.mxu0 0.0
    %379 = vmatprep.subr.mxu0 0.0
    %380 = vmatpush2.msra.mxu0 0.0
    %381 = vmatprep.subr.mxu0 0.0
    %382 = vmatpush2.msra.mxu0 0.0
    %383 = vmatprep.subr.mxu0 0.0
    %384 = vmatpush2.msra.mxu0 0.0
    %385 = vmatprep.subr.mxu0 0.0
    %386 = vmatpush2.msra.mxu0 0.0
    %387 = vmatprep.subr.mxu0 0.0
    %388 = vmatpush2.msra.mxu0 0.0
    %389 = vmatprep.subr.mxu0 0.0
    %390 = vmatpush2.msra.mxu0 0.0
    %391 = vmatprep.subr.mxu0 0.0
    %392 = vmatpush2.msra.mxu0 0.0
    %393 = vmatprep.subr.mxu0 0.0
    %394 = vmatpush2.msra.mxu0 0.0
    %395 = vmatprep.subr.mxu0 0.0
    %396 = vmatpush2.msra.mxu0 0.0
    %397 = vmatprep.subr.mxu0 0.0
    %398 = vmatpush2.msra.mxu0 0.0
    %399 = vmatprep.subr.mxu0 0.0
    %400 = vmatpush2.msra.mxu0 0.0
    %401 = vmatprep.subr.mxu0 0.0
    %402 = vmatpush2.msra.mxu0 0.0
    %403 = vmatprep.subr.mxu0 0.0
    %404 = vmatpush2.msra.mxu0 0.0
    %405 = vmatprep.subr.mxu0 0.0
    %406 = vmatpush2.msra.mxu0 0.0
    %407 = vmatprep.subr.mxu0 0.0
    %408 = vmatpush2.msra.mxu0 0.0
    %409 = vmatprep.mubr.f32.mxu0 0.0
    %410 = vmatmul.mubr.f32.gmra.mxu0 %v340
    %v411 = vpop.f32.mrf.mxu0
    %v412 = vadd.f32 0.0, %v411
    %v413 = vpop.f32.mrf.mxu0
    %v414 = vadd.f32 0.0, %v413
    %415 = vmatprep.mubr.f32.mxu0 0.0
    %416 = vmatmul.mubr.f32.gmra.mxu0 %v343
    %v417 = vpop.f32.mrf.mxu0
    %v418 = vadd.f32 0.0, %v417
    %v419 = vpop.f32.mrf.mxu0
    %v420 = vadd.f32 0.0, %v419
    %421 = vdwg.mxu0
    %422 = vmatprep.subr.mxu0 0.0
    %423 = vmatpush1.msra.mxu0 0.0
    %424 = vmatprep.subr.mxu0 0.0
    %425 = vmatpush1.msra.mxu0 0.0
    %426 = vmatprep.subr.mxu0 0.0
    %427 = vmatpush1.msra.mxu0 0.0
    %428 = vmatprep.subr.mxu0 0.0
    %429 = vmatpush1.msra.mxu0 0.0
    %430 = vmatprep.subr.mxu0 0.0
    %431 = vmatpush1.msra.mxu0 0.0
    %432 = vmatprep.subr.mxu0 0.0
    %433 = vmatpush1.msra.mxu0 0.0
    %434 = vmatprep.subr.mxu0 0.0
    %435 = vmatpush1.msra.mxu0 0.0
    %436 = vmatprep.subr.mxu0 0.0
    %437 = vmatpush1.msra.mxu0 0.0
    %438 = vmatprep.subr.mxu0 0.0
    %439 = vmatpush1.msra.mxu0 0.0
    %440 = vmatprep.subr.mxu0 0.0
    %441 = vmatpush1.msra.mxu0 0.0
    %442 = vmatprep.subr.mxu0 0.0
    %443 = vmatpush1.msra.mxu0 0.0
    %444 = vmatprep.subr.mxu0 0.0
    %445 = vmatpush1.msra.mxu0 0.0
    %446 = vmatprep.subr.mxu0 0.0
    %447 = vmatpush1.msra.mxu0 0.0
    %448 = vmatprep.subr.mxu0 0.0
    %449 = vmatpush1.msra.mxu0 0.0
    %450 = vmatprep.subr.mxu0 %v152
    %451 = vmatpush1.msra.mxu0 %v151
    %452 = vmatprep.subr.mxu0 %v148
    %453 = vmatpush1.msra.mxu0 %v147
    %454 = vmatprep.subr.mxu0 0.0
    %455 = vmatpush2.msra.mxu0 0.0
    %456 = vmatprep.subr.mxu0 0.0
    %457 = vmatpush2.msra.mxu0 0.0
    %458 = vmatprep.subr.mxu0 0.0
    %459 = vmatpush2.msra.mxu0 0.0
    %460 = vmatprep.subr.mxu0 0.0
    %461 = vmatpush2.msra.mxu0 0.0
    %462 = vmatprep.subr.mxu0 0.0
    %463 = vmatpush2.msra.mxu0 0.0
    %464 = vmatprep.subr.mxu0 0.0
    %465 = vmatpush2.msra.mxu0 0.0
    %466 = vmatprep.subr.mxu0 0.0
    %467 = vmatpush2.msra.mxu0 0.0
    %468 = vmatprep.subr.mxu0 0.0
    %469 = vmatpush2.msra.mxu0 0.0
    %470 = vmatprep.subr.mxu0 0.0
    %471 = vmatpush2.msra.mxu0 0.0
    %472 = vmatprep.subr.mxu0 0.0
    %473 = vmatpush2.msra.mxu0 0.0
    %474 = vmatprep.subr.mxu0 0.0
    %475 = vmatpush2.msra.mxu0 0.0
    %476 = vmatprep.subr.mxu0 0.0
    %477 = vmatpush2.msra.mxu0 0.0
    %478 = vmatprep.subr.mxu0 0.0
    %479 = vmatpush2.msra.mxu0 0.0
    %480 = vmatprep.subr.mxu0 0.0
    %481 = vmatpush2.msra.mxu0 0.0
    %482 = vmatprep.subr.mxu0 0.0
    %483 = vmatpush2.msra.mxu0 0.0
    %484 = vmatprep.subr.mxu0 0.0
    %485 = vmatpush2.msra.mxu0 0.0
    %486 = vmatprep.mubr.f32.mxu0 0.0
    %487 = vmatmul.mubr.f32.gmra.mxu0 %v340
    %v488 = vpop.f32.mrf.mxu0
    %v489 = vadd.f32 0.0, %v488
    %v490 = vpop.f32.mrf.mxu0
    %v491 = vadd.f32 0.0, %v490
    %492 = vmatprep.mubr.f32.mxu0 0.0
    %493 = vmatmul.mubr.f32.gmra.mxu0 %v343
    %v494 = vpop.f32.mrf.mxu0
    %v495 = vadd.f32 0.0, %v494
    %v496 = vpop.f32.mrf.mxu0
    %v497 = vadd.f32 0.0, %v496
    %498 = vdwg.mxu0
    %v499 = vmul.f32 %v252, %v412
    %v500 = vmul.f32 %v254, %v414
    %v501 = vmul.f32 %v329, %v489
    %v502 = vmul.f32 %v331, %v491
    %v503 = vmul.f32 %v258, %v418
    %v504 = vmul.f32 %v260, %v420
    %v505 = vmul.f32 %v335, %v495
    %v506 = vmul.f32 %v337, %v497
    %v507 = vrot.slane %v499, 4
    %v508 = vadd.f32 %v499, %v507
    %v509 = vrot.slane %v508, 2
    %v510 = vadd.f32 %v508, %v509
    %v511 = vrot.slane %v510, 1
    %v512 = vadd.f32 %v510, %v511
    %v513 = vrot.slane %v500, 4
    %v514 = vadd.f32 %v500, %v513
    %v515 = vrot.slane %v514, 2
    %v516 = vadd.f32 %v514, %v515
    %v517 = vrot.slane %v516, 1
    %v518 = vadd.f32 %v516, %v517
    %v519 = vrot.slane %v501, 4
    %v520 = vadd.f32 %v501, %v519
    %v521 = vrot.slane %v520, 2
    %v522 = vadd.f32 %v520, %v521
    %v523 = vrot.slane %v522, 1
    %v524 = vadd.f32 %v522, %v523
    %v525 = vrot.slane %v502, 4
    %v526 = vadd.f32 %v502, %v525
    %v527 = vrot.slane %v526, 2
    %v528 = vadd.f32 %v526, %v527
    %v529 = vrot.slane %v528, 1
    %v530 = vadd.f32 %v528, %v529
    %v531 = vrot.slane %v503, 4
    %v532 = vadd.f32 %v503, %v531
    %v533 = vrot.slane %v532, 2
    %v534 = vadd.f32 %v532, %v533
    %v535 = vrot.slane %v534, 1
    %v536 = vadd.f32 %v534, %v535
    %v537 = vrot.slane %v504, 4
    %v538 = vadd.f32 %v504, %v537
    %v539 = vrot.slane %v538, 2
    %v540 = vadd.f32 %v538, %v539
    %v541 = vrot.slane %v540, 1
    %v542 = vadd.f32 %v540, %v541
    %v543 = vrot.slane %v505, 4
    %v544 = vadd.f32 %v505, %v543
    %v545 = vrot.slane %v544, 2
    %v546 = vadd.f32 %v544, %v545
    %v547 = vrot.slane %v546, 1
    %v548 = vadd.f32 %v546, %v547
    %v549 = vrot.slane %v506, 4
    %v550 = vadd.f32 %v506, %v549
    %v551 = vrot.slane %v550, 2
    %v552 = vadd.f32 %v550, %v551
    %v553 = vrot.slane %v552, 1
    %v554 = vadd.f32 %v552, %v553
    %v556 = vlaneseq
    %v557 = vshrl.u32 %v556, 7
    %v558 = vsub.s32 0, %v557
    %v559 = vrot.slane %v154, %v558
    %v560 = vlaneseq
    %v561 = vshrl.u32 %v560, 7
    %v562 = vsub.s32 1, %v561
    %v563 = vrot.slane %v154, %v562
    %v564 = vlaneseq
    %v565 = vshrl.u32 %v564, 7
    %v566 = vsub.s32 2, %v565
    %v567 = vrot.slane %v154, %v566
    %v568 = vlaneseq
    %v569 = vshrl.u32 %v568, 7
    %v570 = vsub.s32 3, %v569
    %v571 = vrot.slane %v154, %v570
    %v576 = vmul.f32 %v512, %v559
    %v577 = vmul.f32 %v518, %v563
    %v578 = vmul.f32 %v524, %v567
    %v579 = vmul.f32 %v530, %v571
    %v580 = vmul.f32 %v536, %v559
    %v581 = vmul.f32 %v542, %v563
    %v582 = vmul.f32 %v548, %v567
    %v583 = vmul.f32 %v554, %v571
    %v584 = vmul.f32 %v576, %v576
    %v585 = vmul.f32 %v577, %v577
    %v586 = vmul.f32 %v578, %v578
    %v587 = vmul.f32 %v579, %v579
    %v588 = vmul.f32 %v580, %v580
    %v589 = vmul.f32 %v581, %v581
    %v590 = vmul.f32 %v582, %v582
    %v591 = vmul.f32 %v583, %v583
    %v592 = vld [vmem:[%s3] sm:$0xff]
    %v593 = vld [vmem:[%s3 + $0x8] sm:$0xff]
    %v594 = vld [vmem:[%s3 + $0x10] sm:$0xff]
    %v595 = vld [vmem:[%s3 + $0x18] sm:$0xff]
    %v596 = vld [vmem:[%s3 + $0x20] sm:$0xff]
    %v597 = vld [vmem:[%s3 + $0x28] sm:$0xff]
    %v598 = vld [vmem:[%s3 + $0x30] sm:$0xff]
    %v599 = vld [vmem:[%s3 + $0x38] sm:$0xff]
    %v600 = vld [vmem:[%s3 + $0x40] sm:$0xff]
    %v601 = vld [vmem:[%s3 + $0x48] sm:$0xff]
    %v602 = vld [vmem:[%s3 + $0x50] sm:$0xff]
    %v603 = vld [vmem:[%s3 + $0x58] sm:$0xff]
    %v604 = vld [vmem:[%s3 + $0x60] sm:$0xff]
    %v605 = vld [vmem:[%s3 + $0x68] sm:$0xff]
    %v606 = vld [vmem:[%s3 + $0x70] sm:$0xff]
    %v607 = vld [vmem:[%s3 + $0x78] sm:$0xff]
    %v608 = vld [vmem:[%s3 + $0x80] sm:$0xff]
    %v609 = vld [vmem:[%s3 + $0x88] sm:$0xff]
    %v610 = vld [vmem:[%s3 + $0x90] sm:$0xff]
    %v611 = vld [vmem:[%s3 + $0x98] sm:$0xff]
    %v612 = vld [vmem:[%s3 + $0xa0] sm:$0xff]
    %v613 = vld [vmem:[%s3 + $0xa8] sm:$0xff]
    %v614 = vld [vmem:[%s3 + $0xb0] sm:$0xff]
    %v615 = vld [vmem:[%s3 + $0xb8] sm:$0xff]
    %v616 = vld [vmem:[%s3 + $0xc0] sm:$0xff]
    %v617 = vld [vmem:[%s3 + $0xc8] sm:$0xff]
    %v618 = vld [vmem:[%s3 + $0xd0] sm:$0xff]
    %v619 = vld [vmem:[%s3 + $0xd8] sm:$0xff]
    %v620 = vld [vmem:[%s3 + $0xe0] sm:$0xff]
    %v621 = vld [vmem:[%s3 + $0xe8] sm:$0xff]
    %v622 = vld [vmem:[%s3 + $0xf0] sm:$0xff]
    %v623 = vld [vmem:[%s3 + $0xf8] sm:$0xff]
    %v624 = vld [vmem:[%s3 + $0x100] sm:$0xff]
    %v625 = vld [vmem:[%s3 + $0x108] sm:$0xff]
    %v626 = vld [vmem:[%s3 + $0x110] sm:$0xff]
    %v627 = vld [vmem:[%s3 + $0x118] sm:$0xff]
    %v628 = vld [vmem:[%s3 + $0x120] sm:$0xff]
    %v629 = vld [vmem:[%s3 + $0x128] sm:$0xff]
    %v630 = vld [vmem:[%s3 + $0x130] sm:$0xff]
    %v631 = vld [vmem:[%s3 + $0x138] sm:$0xff]
    %v632 = vld [vmem:[%s3 + $0x140] sm:$0xff]
    %v633 = vld [vmem:[%s3 + $0x148] sm:$0xff]
    %v634 = vld [vmem:[%s3 + $0x150] sm:$0xff]
    %v635 = vld [vmem:[%s3 + $0x158] sm:$0xff]
    %v636 = vld [vmem:[%s3 + $0x160] sm:$0xff]
    %v637 = vld [vmem:[%s3 + $0x168] sm:$0xff]
    %v638 = vld [vmem:[%s3 + $0x170] sm:$0xff]
    %v639 = vld [vmem:[%s3 + $0x178] sm:$0xff]
    %v640 = vld [vmem:[%s3 + $0x180] sm:$0xff]
    %v641 = vld [vmem:[%s3 + $0x188] sm:$0xff]
    %v642 = vld [vmem:[%s3 + $0x190] sm:$0xff]
    %v643 = vld [vmem:[%s3 + $0x198] sm:$0xff]
    %v644 = vld [vmem:[%s3 + $0x1a0] sm:$0xff]
    %v645 = vld [vmem:[%s3 + $0x1a8] sm:$0xff]
    %v646 = vld [vmem:[%s3 + $0x1b0] sm:$0xff]
    %v647 = vld [vmem:[%s3 + $0x1b8] sm:$0xff]
    %v648 = vld [vmem:[%s3 + $0x1c0] sm:$0xff]
    %v649 = vld [vmem:[%s3 + $0x1c8] sm:$0xff]
    %v650 = vld [vmem:[%s3 + $0x1d0] sm:$0xff]
    %v651 = vld [vmem:[%s3 + $0x1d8] sm:$0xff]
    %v652 = vld [vmem:[%s3 + $0x1e0] sm:$0xff]
    %v653 = vld [vmem:[%s3 + $0x1e8] sm:$0xff]
    %v654 = vld [vmem:[%s3 + $0x1f0] sm:$0xff]
    %v655 = vld [vmem:[%s3 + $0x1f8] sm:$0xff]
    %v664 = vrot.slane %v588, 7
    %vm665 = vcmask 1041409
    %v666 = vsel %vm665, %v664, %v584
    %v667 = vrot.slane %v589, 7
    %v668 = vsel %vm665, %v667, %v585
    %v669 = vrot.slane %v590, 7
    %v670 = vsel %vm665, %v669, %v586
    %v671 = vrot.slane %v591, 7
    %v672 = vsel %vm665, %v671, %v587
    %677 = vmatprep.subr.mxu0 0.0
    %678 = vmatpush1.msra.mxu0 %v607
    %679 = vmatprep.subr.mxu0 0.0
    %680 = vmatpush1.msra.mxu0 %v606
    %681 = vmatprep.subr.mxu0 0.0
    %682 = vmatpush1.msra.mxu0 %v605
    %683 = vmatprep.subr.mxu0 0.0
    %684 = vmatpush1.msra.mxu0 %v604
    %685 = vmatprep.subr.mxu0 0.0
    %686 = vmatpush1.msra.mxu0 %v603
    %687 = vmatprep.subr.mxu0 0.0
    %688 = vmatpush1.msra.mxu0 %v602
    %689 = vmatprep.subr.mxu0 0.0
    %690 = vmatpush1.msra.mxu0 %v601
    %691 = vmatprep.subr.mxu0 0.0
    %692 = vmatpush1.msra.mxu0 %v600
    %693 = vmatprep.subr.mxu0 0.0
    %694 = vmatpush1.msra.mxu0 %v599
    %695 = vmatprep.subr.mxu0 0.0
    %696 = vmatpush1.msra.mxu0 %v598
    %697 = vmatprep.subr.mxu0 0.0
    %698 = vmatpush1.msra.mxu0 %v597
    %699 = vmatprep.subr.mxu0 0.0
    %700 = vmatpush1.msra.mxu0 %v596
    %701 = vmatprep.subr.mxu0 0.0
    %702 = vmatpush1.msra.mxu0 %v595
    %703 = vmatprep.subr.mxu0 0.0
    %704 = vmatpush1.msra.mxu0 %v594
    %705 = vmatprep.subr.mxu0 0.0
    %706 = vmatpush1.msra.mxu0 %v593
    %707 = vmatprep.subr.mxu0 0.0
    %708 = vmatpush1.msra.mxu0 %v592
    %709 = vmatprep.subr.mxu0 0.0
    %710 = vmatpush2.msra.mxu0 %v623
    %711 = vmatprep.subr.mxu0 0.0
    %712 = vmatpush2.msra.mxu0 %v622
    %713 = vmatprep.subr.mxu0 0.0
    %714 = vmatpush2.msra.mxu0 %v621
    %715 = vmatprep.subr.mxu0 0.0
    %716 = vmatpush2.msra.mxu0 %v620
    %717 = vmatprep.subr.mxu0 0.0
    %718 = vmatpush2.msra.mxu0 %v619
    %719 = vmatprep.subr.mxu0 0.0
    %720 = vmatpush2.msra.mxu0 %v618
    %721 = vmatprep.subr.mxu0 0.0
    %722 = vmatpush2.msra.mxu0 %v617
    %723 = vmatprep.subr.mxu0 0.0
    %724 = vmatpush2.msra.mxu0 %v616
    %725 = vmatprep.subr.mxu0 0.0
    %726 = vmatpush2.msra.mxu0 %v615
    %727 = vmatprep.subr.mxu0 0.0
    %728 = vmatpush2.msra.mxu0 %v614
    %729 = vmatprep.subr.mxu0 0.0
    %730 = vmatpush2.msra.mxu0 %v613
    %731 = vmatprep.subr.mxu0 0.0
    %732 = vmatpush2.msra.mxu0 %v612
    %733 = vmatprep.subr.mxu0 0.0
    %734 = vmatpush2.msra.mxu0 %v611
    %735 = vmatprep.subr.mxu0 0.0
    %736 = vmatpush2.msra.mxu0 %v610
    %737 = vmatprep.subr.mxu0 0.0
    %738 = vmatpush2.msra.mxu0 %v609
    %739 = vmatprep.subr.mxu0 0.0
    %740 = vmatpush2.msra.mxu0 %v608
    %741 = vmatprep.mubr.f32.mxu0 %v668
    %742 = vmatmul.mubr.f32.gmra.mxu0 %v666
    %v743 = vpop.f32.mrf.mxu0
    %v744 = vadd.f32 0.0, %v743
    %v745 = vpop.f32.mrf.mxu0
    %746 = vdwg.mxu0
    %747 = vmatprep.subr.mxu0 0.0
    %748 = vmatpush1.msra.mxu0 %v639
    %749 = vmatprep.subr.mxu0 0.0
    %750 = vmatpush1.msra.mxu0 %v638
    %751 = vmatprep.subr.mxu0 0.0
    %752 = vmatpush1.msra.mxu0 %v637
    %753 = vmatprep.subr.mxu0 0.0
    %754 = vmatpush1.msra.mxu0 %v636
    %755 = vmatprep.subr.mxu0 0.0
    %756 = vmatpush1.msra.mxu0 %v635
    %757 = vmatprep.subr.mxu0 0.0
    %758 = vmatpush1.msra.mxu0 %v634
    %759 = vmatprep.subr.mxu0 0.0
    %760 = vmatpush1.msra.mxu0 %v633
    %761 = vmatprep.subr.mxu0 0.0
    %762 = vmatpush1.msra.mxu0 %v632
    %763 = vmatprep.subr.mxu0 0.0
    %764 = vmatpush1.msra.mxu0 %v631
    %765 = vmatprep.subr.mxu0 0.0
    %766 = vmatpush1.msra.mxu0 %v630
    %767 = vmatprep.subr.mxu0 0.0
    %768 = vmatpush1.msra.mxu0 %v629
    %769 = vmatprep.subr.mxu0 0.0
    %770 = vmatpush1.msra.mxu0 %v628
    %771 = vmatprep.subr.mxu0 0.0
    %772 = vmatpush1.msra.mxu0 %v627
    %773 = vmatprep.subr.mxu0 0.0
    %774 = vmatpush1.msra.mxu0 %v626
    %775 = vmatprep.subr.mxu0 0.0
    %776 = vmatpush1.msra.mxu0 %v625
    %777 = vmatprep.subr.mxu0 0.0
    %778 = vmatpush1.msra.mxu0 %v624
    %779 = vmatprep.subr.mxu0 0.0
    %780 = vmatpush2.msra.mxu0 %v655
    %781 = vmatprep.subr.mxu0 0.0
    %782 = vmatpush2.msra.mxu0 %v654
    %783 = vmatprep.subr.mxu0 0.0
    %784 = vmatpush2.msra.mxu0 %v653
    %785 = vmatprep.subr.mxu0 0.0
    %786 = vmatpush2.msra.mxu0 %v652
    %787 = vmatprep.subr.mxu0 0.0
    %788 = vmatpush2.msra.mxu0 %v651
    %789 = vmatprep.subr.mxu0 0.0
    %790 = vmatpush2.msra.mxu0 %v650
    %791 = vmatprep.subr.mxu0 0.0
    %792 = vmatpush2.msra.mxu0 %v649
    %793 = vmatprep.subr.mxu0 0.0
    %794 = vmatpush2.msra.mxu0 %v648
    %795 = vmatprep.subr.mxu0 0.0
    %796 = vmatpush2.msra.mxu0 %v647
    %797 = vmatprep.subr.mxu0 0.0
    %798 = vmatpush2.msra.mxu0 %v646
    %799 = vmatprep.subr.mxu0 0.0
    %800 = vmatpush2.msra.mxu0 %v645
    %801 = vmatprep.subr.mxu0 0.0
    %802 = vmatpush2.msra.mxu0 %v644
    %803 = vmatprep.subr.mxu0 0.0
    %804 = vmatpush2.msra.mxu0 %v643
    %805 = vmatprep.subr.mxu0 0.0
    %806 = vmatpush2.msra.mxu0 %v642
    %807 = vmatprep.subr.mxu0 0.0
    %808 = vmatpush2.msra.mxu0 %v641
    %809 = vmatprep.subr.mxu0 0.0
    %810 = vmatpush2.msra.mxu0 %v640
    %811 = vmatprep.mubr.f32.mxu0 %v672
    %812 = vmatmul.mubr.f32.gmra.mxu0 %v670
    %v813 = vpop.f32.mrf.mxu0
    %v814 = vadd.f32 %v744, %v813
    %v815 = vpop.f32.mrf.mxu0
    %816 = vdwg.mxu0
    %v817 = vmax.f32 %v814, 1e-24
    %v818 = vrsqrt.pop %v817
    %v819 = vmul.f32 %v818, %v818
    %v820 = vmul.f32 %v814, %v819
    %vm821 = vcmask 123904
    %v822 = vsel %vm821, %v820, 0.0
    %823 = vadd.xlane.f32.xlu0 %v822
    %v824 = vpop.xlane.xlu0 %823
    %v825 = vmax.f32 %v824, 1e-24
    %v826 = vrsqrt.pop %v825
    %v827 = vmul.f32 %v818, %v826
    %v829 = vsel %vm106, %v827, 0
    %831 = vmatprep.subr.mxu0 0.0
    %832 = vmatpush1.msra.mxu0 0.0
    %833 = vmatprep.subr.mxu0 0.0
    %834 = vmatpush1.msra.mxu0 0.0
    %835 = vmatprep.subr.mxu0 0.0
    %836 = vmatpush1.msra.mxu0 0.0
    %837 = vmatprep.subr.mxu0 0.0
    %838 = vmatpush1.msra.mxu0 0.0
    %839 = vmatprep.subr.mxu0 0.0
    %840 = vmatpush1.msra.mxu0 0.0
    %841 = vmatprep.subr.mxu0 0.0
    %842 = vmatpush1.msra.mxu0 0.0
    %843 = vmatprep.subr.mxu0 0.0
    %844 = vmatpush1.msra.mxu0 0.0
    %845 = vmatprep.subr.mxu0 0.0
    %846 = vmatpush1.msra.mxu0 0.0
    %847 = vmatprep.subr.mxu0 0.0
    %848 = vmatpush1.msra.mxu0 0.0
    %849 = vmatprep.subr.mxu0 0.0
    %850 = vmatpush1.msra.mxu0 0.0
    %851 = vmatprep.subr.mxu0 0.0
    %852 = vmatpush1.msra.mxu0 0.0
    %853 = vmatprep.subr.mxu0 0.0
    %854 = vmatpush1.msra.mxu0 0.0
    %855 = vmatprep.subr.mxu0 0.0
    %856 = vmatpush1.msra.mxu0 0.0
    %857 = vmatprep.subr.mxu0 0.0
    %858 = vmatpush1.msra.mxu0 0.0
    %859 = vmatprep.subr.mxu0 %v150
    %860 = vmatpush1.msra.mxu0 %v149
    %861 = vmatprep.subr.mxu0 %v146
    %862 = vmatpush1.msra.mxu0 %v145
    %863 = vmatprep.subr.mxu0 0.0
    %864 = vmatpush2.msra.mxu0 0.0
    %865 = vmatprep.subr.mxu0 0.0
    %866 = vmatpush2.msra.mxu0 0.0
    %867 = vmatprep.subr.mxu0 0.0
    %868 = vmatpush2.msra.mxu0 0.0
    %869 = vmatprep.subr.mxu0 0.0
    %870 = vmatpush2.msra.mxu0 0.0
    %871 = vmatprep.subr.mxu0 0.0
    %872 = vmatpush2.msra.mxu0 0.0
    %873 = vmatprep.subr.mxu0 0.0
    %874 = vmatpush2.msra.mxu0 0.0
    %875 = vmatprep.subr.mxu0 0.0
    %876 = vmatpush2.msra.mxu0 0.0
    %877 = vmatprep.subr.mxu0 0.0
    %878 = vmatpush2.msra.mxu0 0.0
    %879 = vmatprep.subr.mxu0 0.0
    %880 = vmatpush2.msra.mxu0 0.0
    %881 = vmatprep.subr.mxu0 0.0
    %882 = vmatpush2.msra.mxu0 0.0
    %883 = vmatprep.subr.mxu0 0.0
    %884 = vmatpush2.msra.mxu0 0.0
    %885 = vmatprep.subr.mxu0 0.0
    %886 = vmatpush2.msra.mxu0 0.0
    %887 = vmatprep.subr.mxu0 0.0
    %888 = vmatpush2.msra.mxu0 0.0
    %889 = vmatprep.subr.mxu0 0.0
    %890 = vmatpush2.msra.mxu0 0.0
    %891 = vmatprep.subr.mxu0 0.0
    %892 = vmatpush2.msra.mxu0 0.0
    %893 = vmatprep.subr.mxu0 0.0
    %894 = vmatpush2.msra.mxu0 0.0
    %895 = vmatprep.mubr.f32.mxu0 0.0
    %896 = vmatmul.mubr.f32.gmra.mxu0 %v829
    %v897 = vpop.f32.mrf.mxu0
    %v898 = vadd.f32 0.0, %v897
    %v899 = vpop.f32.mrf.mxu0
    %v900 = vadd.f32 0.0, %v899
    %901 = vdwg.mxu0
    %902 = vmatprep.subr.mxu0 0.0
    %903 = vmatpush1.msra.mxu0 0.0
    %904 = vmatprep.subr.mxu0 0.0
    %905 = vmatpush1.msra.mxu0 0.0
    %906 = vmatprep.subr.mxu0 0.0
    %907 = vmatpush1.msra.mxu0 0.0
    %908 = vmatprep.subr.mxu0 0.0
    %909 = vmatpush1.msra.mxu0 0.0
    %910 = vmatprep.subr.mxu0 0.0
    %911 = vmatpush1.msra.mxu0 0.0
    %912 = vmatprep.subr.mxu0 0.0
    %913 = vmatpush1.msra.mxu0 0.0
    %914 = vmatprep.subr.mxu0 0.0
    %915 = vmatpush1.msra.mxu0 0.0
    %916 = vmatprep.subr.mxu0 0.0
    %917 = vmatpush1.msra.mxu0 0.0
    %918 = vmatprep.subr.mxu0 0.0
    %919 = vmatpush1.msra.mxu0 0.0
    %920 = vmatprep.subr.mxu0 0.0
    %921 = vmatpush1.msra.mxu0 0.0
    %922 = vmatprep.subr.mxu0 0.0
    %923 = vmatpush1.msra.mxu0 0.0
    %924 = vmatprep.subr.mxu0 0.0
    %925 = vmatpush1.msra.mxu0 0.0
    %926 = vmatprep.subr.mxu0 0.0
    %927 = vmatpush1.msra.mxu0 0.0
    %928 = vmatprep.subr.mxu0 0.0
    %929 = vmatpush1.msra.mxu0 0.0
    %930 = vmatprep.subr.mxu0 %v152
    %931 = vmatpush1.msra.mxu0 %v151
    %932 = vmatprep.subr.mxu0 %v148
    %933 = vmatpush1.msra.mxu0 %v147
    %934 = vmatprep.subr.mxu0 0.0
    %935 = vmatpush2.msra.mxu0 0.0
    %936 = vmatprep.subr.mxu0 0.0
    %937 = vmatpush2.msra.mxu0 0.0
    %938 = vmatprep.subr.mxu0 0.0
    %939 = vmatpush2.msra.mxu0 0.0
    %940 = vmatprep.subr.mxu0 0.0
    %941 = vmatpush2.msra.mxu0 0.0
    %942 = vmatprep.subr.mxu0 0.0
    %943 = vmatpush2.msra.mxu0 0.0
    %944 = vmatprep.subr.mxu0 0.0
    %945 = vmatpush2.msra.mxu0 0.0
    %946 = vmatprep.subr.mxu0 0.0
    %947 = vmatpush2.msra.mxu0 0.0
    %948 = vmatprep.subr.mxu0 0.0
    %949 = vmatpush2.msra.mxu0 0.0
    %950 = vmatprep.subr.mxu0 0.0
    %951 = vmatpush2.msra.mxu0 0.0
    %952 = vmatprep.subr.mxu0 0.0
    %953 = vmatpush2.msra.mxu0 0.0
    %954 = vmatprep.subr.mxu0 0.0
    %955 = vmatpush2.msra.mxu0 0.0
    %956 = vmatprep.subr.mxu0 0.0
    %957 = vmatpush2.msra.mxu0 0.0
    %958 = vmatprep.subr.mxu0 0.0
    %959 = vmatpush2.msra.mxu0 0.0
    %960 = vmatprep.subr.mxu0 0.0
    %961 = vmatpush2.msra.mxu0 0.0
    %962 = vmatprep.subr.mxu0 0.0
    %963 = vmatpush2.msra.mxu0 0.0
    %964 = vmatprep.subr.mxu0 0.0
    %965 = vmatpush2.msra.mxu0 0.0
    %966 = vmatprep.mubr.f32.mxu0 0.0
    %967 = vmatmul.mubr.f32.gmra.mxu0 %v829
    %v968 = vpop.f32.mrf.mxu0
    %v969 = vadd.f32 0.0, %v968
    %v970 = vpop.f32.mrf.mxu0
    %v971 = vadd.f32 0.0, %v970
    %972 = vdwg.mxu0
    %v977 = vrot.slane %v898, 1
    %v978 = vrot.slane %v900, 1
    %v979 = vrot.slane %v969, 1
    %v980 = vrot.slane %v971, 1
    %v989 = vmul.f32 %v576, %v898
    %v990 = vmul.f32 %v577, %v900
    %v991 = vmul.f32 %v578, %v969
    %v992 = vmul.f32 %v579, %v971
    %v993 = vmul.f32 %v580, %v977
    %v994 = vmul.f32 %v581, %v978
    %v995 = vmul.f32 %v582, %v979
    %v996 = vmul.f32 %v583, %v980
    %v1005 = vcombine.low %v989, %v990
    %v1006 = vcombine.low %v991, %v992
    %v1008 = vunpack.c.l.s4 1983009808
    %v1009 = vunpack.c.0.s8 %v1008
    %v1010 = vlaneseq
    %v1011 = vshrl.u32 %v1010, 7
    %v1012 = vsub.s32 %v1009, %v1011
    %v1013 = vrot.slane %v1005, %v1012
    %v1015 = vunpack.c.l.s4 1983009808
    %v1016 = vunpack.c.0.s8 %v1015
    %v1017 = vlaneseq
    %v1018 = vshrl.u32 %v1017, 7
    %v1019 = vsub.s32 %v1016, %v1018
    %v1020 = vrot.slane %v1006, %v1019
    %v1021 = vcombine.low %v1013, %v1020
    %v1022 = vcombine.low %v993, %v994
    %v1023 = vcombine.low %v995, %v996
    %v1025 = vunpack.c.l.s4 1983009808
    %v1026 = vunpack.c.0.s8 %v1025
    %v1027 = vlaneseq
    %v1028 = vshrl.u32 %v1027, 7
    %v1029 = vsub.s32 %v1026, %v1028
    %v1030 = vrot.slane %v1022, %v1029
    %v1032 = vunpack.c.l.s4 1983009808
    %v1033 = vunpack.c.0.s8 %v1032
    %v1034 = vlaneseq
    %v1035 = vshrl.u32 %v1034, 7
    %v1036 = vsub.s32 %v1033, %v1035
    %v1037 = vrot.slane %v1023, %v1036
    %v1038 = vcombine.low %v1030, %v1037
    %vm1039 = vcmask 1044484
    %v1040 = vsel %vm1039, %v1021, %v1021
    %vm1041 = vcmask 1046534
    %v1042 = vsel %vm1041, %v1021, %v1040
    %v1043 = vrot.slane %v1038, 7
    %v1044 = vsel %vm665, %v1043, %v1042
    %vm1045 = vcmask 1043459
    %v1046 = vsel %vm1045, %v1043, %v1044
    %vm1047 = vcmask 1045509
    %v1048 = vsel %vm1047, %v1043, %v1046
    %vm1049 = vcmask 1047559
    %v1050 = vsel %vm1049, %v1043, %v1048
    %1052 = vst [vmem:[#allocation2] sm:$0xff] %v1050
    // Predicated region
    $region18: #{netvlagd_forward.1} parent=1 // pred_check
      _
    $region19: #{netvlagd_forward.1} parent=1 // pred_check_branch
      %1054 = sbr.rel (0) target = $region21
    $region20: #{netvlagd_forward.1} parent=1 // pred_region
      %s1056 = ssub.s32 128, 128
      %1057 = vsyncadd [#allocation3], %s1056
      %s1059 = sshll.u32 [#allocation2], 4
      %s1060 = int_to_ptr.vmem [resolvable:$true] %s1059
      %1062 = dma.vmem_to_hbm [thread:$0]  %s1060, 128, %s4, [#allocation3]
    $region21: #{netvlagd_forward.1} parent=1 // pred_fallthru
      _
    // Predicated region
    $region22: #{netvlagd_forward.1} parent=1 // pred_check
      _
    $region23: #{netvlagd_forward.1} parent=1 // pred_check_branch
      %1064 = sbr.rel (0) target = $region25
    $region24: #{netvlagd_forward.1} parent=1 // pred_region
      %1065 = dma.done [#allocation3], 128
    $region25: #{netvlagd_forward.1} parent=1 // pred_fallthru
      _
    %1066 = vsyncpa [#allocation3], 1

</llo_original>
